<compile_context>
chip_gen: v5e
topology: v5e:2x2
jax: 0.10.0
libtpu: 0.0.40
codegen_flags: <defaults>
</compile_context>

<pallas_src>
import math

import jax
import jax.numpy as jnp
from jax.experimental import pallas as pl
from jax.experimental.pallas import tpu as pltpu


def _positive_scale_kernel(sp_ref, x_ref, o_ref):
    # sp_ref: (1, TF) f32, already softplus-activated weight (resident row).
    # x_ref / o_ref: (TR, TF) lane-dense tile.
    o_ref[...] = (x_ref[...].astype(jnp.float32) * sp_ref[...]).astype(o_ref.dtype)


def _round_up8(n: int) -> int:
    return ((n + 7) // 8) * 8


def _cdiv(a: int, b: int) -> int:
    return -(-a // b)


def _pick_row_block(R: int, bytes_per_row: int, target_block_bytes: int,
                    min_row_steps: int = 4) -> int:
    """Pick TR (rows per tile): ~target bytes, >=min_row_steps grid steps when
    possible (so v7x's two TensorCores each get >=2 steps), prefer an even
    number of steps for a balanced megacore split."""
    if R <= 8:
        return R  # full-extent block (legal even when R < 8)

    # Size toward the byte target.
    tr = max(8, (target_block_bytes // max(1, bytes_per_row)) // 8 * 8)
    # Guarantee enough grid steps to shard across both v7x TensorCores.
    tr = min(tr, max(8, _round_up8(_cdiv(R, min_row_steps))))
    tr = min(tr, _round_up8(R))

    # Best-effort: make the step count even (balanced 2-TC split).
    steps = _cdiv(R, tr)
    if steps > 1 and steps % 2 == 1:
        for s in (steps + 1, steps - 1):
            if s < 2:
                continue
            cand = max(8, _round_up8(_cdiv(R, s)))
            # Don't let the tile grow more than ~25% past the byte target
            # (keeps 4 double-buffered tiles within the VMEM limit).
            if cand * bytes_per_row > target_block_bytes + target_block_bytes // 4:
                continue
            if _cdiv(R, cand) % 2 == 0:
                tr = cand
                break
    return tr


def positive_scale(x: jax.Array, weight: jax.Array,
                   *, target_block_bytes: int = 8 << 20) -> jax.Array:
    """x: (..., F); weight: (F,) raw (pre-softplus) parameter."""
    *lead, F = x.shape
    assert weight.shape == (F,), (weight.shape, F)

    # Activate the weight once in the wrapper (tiny O(F) work, f32, stable).
    sp = jax.nn.softplus(weight.astype(jnp.float32)).reshape(1, F)

    # Flatten leading dims into a single row axis (metadata-only reshape).
    x2 = x.reshape(-1, F)
    R = x2.shape[0]
    itemsize = jnp.dtype(x.dtype).itemsize

    # Wide-F guard: if an 8-row stripe of the full F exceeds the budget,
    # tile the feature axis in 128-lane multiples as a second grid axis.
    if 8 * F * itemsize > target_block_bytes:
        TF = max(128, (target_block_bytes // (8 * itemsize)) // 128 * 128)
        TF = min(TF, F)
    else:
        TF = F  # full-extent feature block (legal for any F)

    TR = _pick_row_block(R, TF * itemsize, target_block_bytes)

    grid = (pl.cdiv(R, TR), pl.cdiv(F, TF))

    out2 = pl.pallas_call(
        _positive_scale_kernel,
        out_shape=jax.ShapeDtypeStruct((R, F), x.dtype),
        grid_spec=pltpu.PrefetchScalarGridSpec(
            num_scalar_prefetch=0,
            grid=grid,
            in_specs=[
                # Activated weight row: constant row index; re-fetched only
                # when the feature block changes (usually never: 1 f-step).
                pl.BlockSpec((1, TF), lambda i, j: (0, j)),
                # Input row tile.
                pl.BlockSpec((TR, TF), lambda i, j: (i, j)),
            ],
            out_specs=pl.BlockSpec((TR, TF), lambda i, j: (i, j)),
        ),
        compiler_params=pltpu.CompilerParams(
            # Fully elementwise: both axes shard freely across v7x's 2 TCs.
            dimension_semantics=("parallel", "parallel"),
            # 4 live ~8-10 MiB tiles + weight row, with headroom; below v7x's
            # 64 MiB physical VMEM and above v5e's 16 MiB scoped default.
            vmem_limit_bytes=48 << 20,
        ),
    )(sp, x2)

    return out2.reshape(x.shape)


if __name__ == "__main__":
    # Small shapes consistent with the module: batch=2, seq=8, features=128.
    B, S, F = 2, 8, 128
    init_scale = 1.0

    # Deterministic parameter init, matching the PyTorch __init__:
    #   weight = ones(features) * log(e**init_scale - 1)
    weight = jnp.full((F,), math.log(math.pow(math.e, init_scale) - 1.0),
                      dtype=jnp.float32)

    key = jax.random.PRNGKey(0)
    x = jax.random.normal(key, (B, S, F), dtype=jnp.float32)

    out = positive_scale(x, weight)
    out = jax.block_until_ready(out)

    # Reference check in plain JAX.
    ref = x * jax.nn.softplus(weight)
    assert out.shape == x.shape and out.dtype == x.dtype
    assert jnp.allclose(out, ref, atol=1e-6, rtol=1e-6)

    print("KERNEL_OK")
</pallas_src>

<mosaic_0001>
module attributes {stable_mosaic.version = 11 : i64} {
  func.func @_positive_scale_kernel(%arg0: i32, %arg1: i32, %arg2: memref<1x128xf32, #tpu.memory_space<vmem>>, %arg3: memref<8x128xf32, #tpu.memory_space<vmem>>, %arg4: memref<8x128xf32, #tpu.memory_space<vmem>>) attributes {dimension_semantics = [#tpu.dimension_semantics<parallel>, #tpu.dimension_semantics<parallel>], iteration_bounds = array<i64: 2, 1>, scalar_prefetch = 0 : i64, scratch_operands = 0 : i64, tpu.core_type = #tpu.core_type<tc>, window_params = [{transform_indices = @transform_0, window_bounds = array<i64: 1, 128>}, {transform_indices = @transform_1, window_bounds = array<i64: 8, 128>}, {transform_indices = @transform_2, window_bounds = array<i64: 8, 128>}]} {
    %c0 = arith.constant 0 : index
    %c0_0 = arith.constant 0 : index
    %0 = vector.load %arg3[%c0, %c0_0] : memref<8x128xf32, #tpu.memory_space<vmem>>, vector<8x128xf32>
    %c0_1 = arith.constant 0 : index
    %c0_2 = arith.constant 0 : index
    %1 = vector.load %arg2[%c0_1, %c0_2] : memref<1x128xf32, #tpu.memory_space<vmem>>, vector<1x128xf32>
    %2 = vector.broadcast %1 : vector<1x128xf32> to vector<8x128xf32>
    %3 = arith.mulf %0, %2 : vector<8x128xf32>
    %c0_3 = arith.constant 0 : index
    %c0_4 = arith.constant 0 : index
    %4 = vector.load %arg4[%c0_3, %c0_4] : memref<8x128xf32, #tpu.memory_space<vmem>>, vector<8x128xf32>
    tpu.vector_store %arg4[%c0_3, %c0_4], %3 {strides = array<i32>} : memref<8x128xf32, #tpu.memory_space<vmem>>, vector<8x128xf32>,
    return
  }
  func.func @transform_0(%arg0: i32, %arg1: i32) -> (i32, i32) {
    %c0_i32 = arith.constant 0 : i32
    %c0_i32_0 = arith.constant 0 : i32
    return %c0_i32, %arg1 : i32, i32
  }
  func.func @transform_1(%arg0: i32, %arg1: i32) -> (i32, i32) {
    %c0_i32 = arith.constant 0 : i32
    return %arg0, %arg1 : i32, i32
  }
  func.func @transform_2(%arg0: i32, %arg1: i32) -> (i32, i32) {
    %c0_i32 = arith.constant 0 : i32
    return %arg0, %arg1 : i32, i32
  }
}

</mosaic_0001>

<llo_original>
// kernel: tpu_custom_call.1
$region0: #{tpu_custom_call.1}
  #allocation0 [shape = 'u32[]', space=smem, size = 0x4, offset = 0x4, fixed_abs, tag = 'smem constant byte address 0x4 - core index']
  #allocation1 [shape = 'u32[72,128]{1,0:T(1,128)}', space=vmem, size = 0x9000, scoped, tag = 'internal scratch']
  %s0 = inlined_call_operand.hbm [shape: f32[1,128], index: 0, kind: input, shape index: {}]
  %s1 = inlined_call_operand.hbm [shape: f32[16,128], index: 1, kind: input, shape index: {}]
  %s2 = inlined_call_operand.hbm [shape: f32[16,128], index: 2, kind: output, shape index: {}]
  %s3 = sld [smem:[#allocation0]]
  $region49: #{tpu_custom_call.1} parent=0
    _
  %s5 = ssub.s32 1, %s3
  %s6 = scalar_select 0, %s5, %s3
  $region1: #{tpu_custom_call.1} parent=0
    #allocation2 [shape = 'u8[512]{0}', space=vmem, size = 0x400, scoped, tag = 'input window, operand 0, single buffered']
    #allocation3 [shape = 's32[2]{0}', space=sflag, size = 0x8, scoped, tag = 'scoped memory for tpu_custom_call.1']
    #allocation4 [shape = 's32[2]{0}', space=sflag, size = 0x8, scoped, tag = 'scoped memory for tpu_custom_call.1']
    #allocation5 [shape = 'u8[8192]{0}', space=vmem, size = 0x2000, scoped, tag = 'input window, operand 1']
    #allocation6 [shape = 's32[2]{0}', space=sflag, size = 0x8, scoped, tag = 'scoped memory for tpu_custom_call.1']
    #allocation7 [shape = 'u8[8192]{0}', space=vmem, size = 0x2000, scoped, tag = 'output window, operand 0']
    %7 = vsyncpa [#allocation3], 0
    %8 = vsyncpa [#allocation6], 0
    %s9 = scalar_lea.sflag [#allocation6], 1
    %10 = vsyncpa %s9, 0
    %11 = vsyncpa [#allocation4], 0
    %s12 = scalar_lea.sflag [#allocation4], 1
    %13 = vsyncpa %s12, 0
    loop: start=0, step=1, limit=4
    $region2: #{tpu_custom_call.1} parent=1 // loop_pre_header
      _
    $region3: #{tpu_custom_call.1} parent=1 // loop_header
      %s15 = sphi 0, %s19
      %p16 = scmp.ge.s32.totalorder %s15, 4
      %s22 = sphi 0, %s34
      %s23 = sphi 0, %s30
      %s24 = sphi 0, %s22
      %s25 = sphi 0, %s23
      %s26 = sphi 0, %s24
      %s27 = sphi 0, %s25
      %s37 = sphi 0, %s39
      %s40 = sphi 0, %s37
      %s41 = sphi 0, %s40
      %s57 = sphi 0, %s41
      %s65 = sphi 0, %s67
      %s68 = sphi 0, %s65
      %s69 = sphi 0, %s68
      %s85 = sphi 0, %s69
      %s93 = sphi 0, %s95
      %s96 = sphi 0, %s93
      %s97 = sphi 0, %s96
      %s113 = sphi 0, %s97
    $region4: #{tpu_custom_call.1} parent=1 // loop_header_branch
      %18 = sbr.rel (%p16) target = $region8
    $region5: #{tpu_custom_call.1} parent=1 // loop_body
      %s20 = ssub.s32 %s15, 1
      %s21 = ssub.s32 %s15, 2
      %s28 = sadd.s32 1, %s23
      %p29 = scmp.ge.s32.totalorder %s28, 1
      %s30 = scalar_select %p29, 0, %s28
      %s31 = sadd.s32 1, %s22
      %s32 = scalar_select %p29, %s31, %s22
      %p33 = scmp.ge.s32.totalorder %s32, 2
      %s34 = scalar_select %p33, 0, %s32
      %s35 = ssub.s32 %s23, %s30
      %p36 = scmp.eq.s32.totalorder %s35, 0
      %s38 = sadd.s32 %s37, 1
      %s39 = scalar_select %p36, %s37, %s38
      %p42 = pneg %p36
      %p43 = scmp.eq.s32.totalorder %s15, 1
      %p44 = por %p42, %p43
      %p45 = scmp.ne.s32.totalorder %s37, %s40
      %p46 = scmp.eq.s32.totalorder %s15, 0
      %p47 = por %p45, %p46
      %p48 = scmp.ne.s32.totalorder %s37, %s40
      %p49 = scmp.eq.s32.totalorder %s20, 1
      %p50 = por %p48, %p49
      %p51 = scmp.ne.s32.totalorder %s40, %s41
      %p52 = scmp.eq.s32.totalorder %s20, 0
      %p53 = por %p51, %p52
      %p54 = scmp.ne.s32.totalorder %s40, %s41
      %p55 = scmp.eq.s32.totalorder %s21, 1
      %p56 = por %p54, %p55
      %p58 = scmp.ne.s32.totalorder %s41, %s57
      %p59 = scmp.eq.s32.totalorder %s21, 0
      %p60 = por %p58, %p59
      %s61 = ssub.s32 %s22, %s34
      %s62 = ssub.s32 %s23, %s30
      %s63 = sor.u32 %s61, %s62
      %p64 = scmp.eq.s32.totalorder %s63, 0
      %s66 = sadd.s32 %s65, 1
      %s67 = scalar_select %p64, %s65, %s66
      %p70 = pneg %p64
      %p71 = scmp.eq.s32.totalorder %s15, 1
      %p72 = por %p70, %p71
      %p73 = scmp.ne.s32.totalorder %s65, %s68
      %p74 = scmp.eq.s32.totalorder %s15, 0
      %p75 = por %p73, %p74
      %p76 = scmp.ne.s32.totalorder %s65, %s68
      %p77 = scmp.eq.s32.totalorder %s20, 1
      %p78 = por %p76, %p77
      %p79 = scmp.ne.s32.totalorder %s68, %s69
      %p80 = scmp.eq.s32.totalorder %s20, 0
      %p81 = por %p79, %p80
      %p82 = scmp.ne.s32.totalorder %s68, %s69
      %p83 = scmp.eq.s32.totalorder %s21, 1
      %p84 = por %p82, %p83
      %p86 = scmp.ne.s32.totalorder %s69, %s85
      %p87 = scmp.eq.s32.totalorder %s21, 0
      %p88 = por %p86, %p87
      %s89 = ssub.s32 %s22, %s34
      %s90 = ssub.s32 %s23, %s30
      %s91 = sor.u32 %s89, %s90
      %p92 = scmp.eq.s32.totalorder %s91, 0
      %s94 = sadd.s32 %s93, 1
      %s95 = scalar_select %p92, %s93, %s94
      %p98 = pneg %p92
      %p99 = scmp.eq.s32.totalorder %s15, 1
      %p100 = por %p98, %p99
      %p101 = scmp.ne.s32.totalorder %s93, %s96
      %p102 = scmp.eq.s32.totalorder %s15, 0
      %p103 = por %p101, %p102
      %p104 = scmp.ne.s32.totalorder %s93, %s96
      %p105 = scmp.eq.s32.totalorder %s20, 1
      %p106 = por %p104, %p105
      %p107 = scmp.ne.s32.totalorder %s96, %s97
      %p108 = scmp.eq.s32.totalorder %s20, 0
      %p109 = por %p107, %p108
      %p110 = scmp.ne.s32.totalorder %s96, %s97
      %p111 = scmp.eq.s32.totalorder %s21, 1
      %p112 = por %p110, %p111
      %p114 = scmp.ne.s32.totalorder %s97, %s113
      %p115 = scmp.eq.s32.totalorder %s21, 0
      %p116 = por %p114, %p115
      %p117 = scmp.le.s32.totalorder 1, %s15
      %p118 = scmp.lt.s32.totalorder %s15, 3
      %p119 = pnand %p117, %p118
      %p120 = pneg %p119
      // Predicated region
      $region9: #{tpu_custom_call.1} parent=5 // pred_check
        _
      $region10: #{tpu_custom_call.1} parent=5 // pred_check_branch
        %122 = sbr.rel (%p119) target = $region12
      $region11: #{tpu_custom_call.1} parent=5 // pred_region
        %s123 = ssub.s32 %s15, 1
        // Predicated region
        $region13: #{tpu_custom_call.1} parent=11 // pred_check
          %p124 = pneg %p53
        $region14: #{tpu_custom_call.1} parent=11 // pred_check_branch
          %126 = sbr.rel (%p124) target = $region16
        $region15: #{tpu_custom_call.1} parent=11 // pred_region
          %128 = vsyncadd [#allocation3], 0
          %s129 = scalar_lea.hbm %s0, %s25
          %s131 = sshll.u32 %s129, 4
          %s132 = int_to_ptr.hbm [resolvable:$true] %s131
          %s133 = sshll.u32 [#allocation2], 4
          %s134 = int_to_ptr.vmem [resolvable:$true] %s133
          %136 = dma.hbm_to_vmem [thread:$0]  %s132, 16, %s134, [#allocation3]
        $region16: #{tpu_custom_call.1} parent=11 // pred_fallthru
          _
      $region12: #{tpu_custom_call.1} parent=5 // pred_fallthru
        _
      %p137 = scmp.lt.s32.totalorder %s15, 2
      // Predicated region
      $region17: #{tpu_custom_call.1} parent=5 // pred_check
        %p138 = pneg %p137
      $region18: #{tpu_custom_call.1} parent=5 // pred_check_branch
        %140 = sbr.rel (%p138) target = $region20
      $region19: #{tpu_custom_call.1} parent=5 // pred_region
        // Predicated region
        $region21: #{tpu_custom_call.1} parent=19 // pred_check
          %p141 = pneg %p75
        $region22: #{tpu_custom_call.1} parent=19 // pred_check_branch
          %143 = sbr.rel (%p141) target = $region24
        $region23: #{tpu_custom_call.1} parent=19 // pred_region
          %s144 = sand.u32 %s65, 1
          %s145 = scalar_lea.sflag [#allocation6], %s144
          %s146 = sand.u32 %s65, 1
          %s147 = smul.addr %s146, 8
          %s148 = scalar_lea.vmem [#allocation5], %s147
          %150 = vsyncadd %s145, 0
          %s151 = sadd.s32 %s23, %s22
          %s152 = smul.addr %s151, 8
          %s153 = scalar_lea.hbm %s1, %s152
          %s155 = sshll.u32 %s153, 4
          %s156 = int_to_ptr.hbm [resolvable:$true] %s155
          %s157 = sshll.u32 %s148, 4
          %s158 = int_to_ptr.vmem [resolvable:$true] %s157
          %160 = dma.hbm_to_vmem [thread:$0]  %s156, 128, %s158, %s145
        $region24: #{tpu_custom_call.1} parent=19 // pred_fallthru
          _
      $region20: #{tpu_custom_call.1} parent=5 // pred_fallthru
        _
      %p161 = scmp.le.s32.totalorder 1, %s15
      %p162 = scmp.lt.s32.totalorder %s15, 3
      %p163 = pnand %p161, %p162
      %p164 = pneg %p163
      // Predicated region
      $region25: #{tpu_custom_call.1} parent=5 // pred_check
        _
      $region26: #{tpu_custom_call.1} parent=5 // pred_check_branch
        %166 = sbr.rel (%p163) target = $region28
      $region27: #{tpu_custom_call.1} parent=5 // pred_region
        %s167 = ssub.s32 %s15, 1
        // Predicated region
        $region29: #{tpu_custom_call.1} parent=27 // pred_check
          %p168 = pneg %p53
        $region30: #{tpu_custom_call.1} parent=27 // pred_check_branch
          %170 = sbr.rel (%p168) target = $region32
        $region31: #{tpu_custom_call.1} parent=27 // pred_region
          %172 = dma.done [#allocation3], 16
        $region32: #{tpu_custom_call.1} parent=27 // pred_fallthru
          _
        %s173 = sand.u32 %s68, 1
        %s174 = scalar_lea.sflag [#allocation6], %s173
        %s175 = sand.u32 %s68, 1
        %s176 = smul.addr %s175, 8
        %s177 = scalar_lea.vmem [#allocation5], %s176
        // Predicated region
        $region33: #{tpu_custom_call.1} parent=27 // pred_check
          %p178 = pneg %p81
        $region34: #{tpu_custom_call.1} parent=27 // pred_check_branch
          %180 = sbr.rel (%p178) target = $region36
        $region35: #{tpu_custom_call.1} parent=27 // pred_region
          %182 = dma.done %s174, 128
        $region36: #{tpu_custom_call.1} parent=27 // pred_fallthru
          _
        %p183 = pneg %p53
        %p184 = pneg %p50
        %s185 = sand.u32 %s68, 1
        %s186 = scalar_lea.sflag [#allocation6], %s185
        %s187 = sand.u32 %s68, 1
        %s188 = smul.addr %s187, 8
        %s189 = scalar_lea.vmem [#allocation5], %s188
        %p190 = pneg %p81
        %p191 = pneg %p78
        %p192 = pneg %p109
        %p193 = pneg %p106
        %s194 = sand.u32 %s96, 1
        %s195 = scalar_lea.sflag [#allocation4], %s194
        %s196 = sand.u32 %s96, 1
        %s197 = smul.addr %s196, 8
        %s198 = scalar_lea.vmem [#allocation7], %s197
        %v199 = vld [vmem:[%s177] sm:$0xff]
        %v200 = vld [vmem:[#allocation2] sm:$0x1]
        %v202 = vperm.slane %v200, 0
        %v204 = vmul.f32 %v199, %v202
        %205 = vst [vmem:[%s198] sm:$0xff] %v204
        %s206 = sand.u32 %s96, 1
        %s207 = scalar_lea.sflag [#allocation4], %s206
        %s208 = sand.u32 %s96, 1
        %s209 = smul.addr %s208, 8
        %s210 = scalar_lea.vmem [#allocation7], %s209
        // Predicated region
        $region37: #{tpu_custom_call.1} parent=27 // pred_check
          %p211 = pneg %p106
        $region38: #{tpu_custom_call.1} parent=27 // pred_check_branch
          %213 = sbr.rel (%p211) target = $region40
        $region39: #{tpu_custom_call.1} parent=27 // pred_region
          %215 = vsyncadd %s207, 0
          %s216 = sadd.s32 %s25, %s24
          %s217 = smul.addr %s216, 8
          %s218 = scalar_lea.hbm %s2, %s217
          %s220 = sshll.u32 %s210, 4
          %s221 = int_to_ptr.vmem [resolvable:$true] %s220
          %s222 = sshll.u32 %s218, 4
          %s223 = int_to_ptr.hbm [resolvable:$true] %s222
          %225 = dma.vmem_to_hbm [thread:$0]  %s221, 128, %s223, %s207
        $region40: #{tpu_custom_call.1} parent=27 // pred_fallthru
          _
      $region28: #{tpu_custom_call.1} parent=5 // pred_fallthru
        _
      %p226 = scmp.le.s32.totalorder 2, %s15
      // Predicated region
      $region41: #{tpu_custom_call.1} parent=5 // pred_check
        %p227 = pneg %p226
      $region42: #{tpu_custom_call.1} parent=5 // pred_check_branch
        %229 = sbr.rel (%p227) target = $region44
      $region43: #{tpu_custom_call.1} parent=5 // pred_region
        %s230 = ssub.s32 %s15, 2
        // Predicated region
        $region45: #{tpu_custom_call.1} parent=43 // pred_check
          %p231 = pneg %p112
        $region46: #{tpu_custom_call.1} parent=43 // pred_check_branch
          %233 = sbr.rel (%p231) target = $region48
        $region47: #{tpu_custom_call.1} parent=43 // pred_region
          %s234 = sand.u32 %s97, 1
          %s235 = scalar_lea.sflag [#allocation4], %s234
          %s236 = sand.u32 %s97, 1
          %s237 = smul.addr %s236, 8
          %s238 = scalar_lea.vmem [#allocation7], %s237
          %240 = dma.done %s235, 128
        $region48: #{tpu_custom_call.1} parent=43 // pred_fallthru
          _
      $region44: #{tpu_custom_call.1} parent=5 // pred_fallthru
        _
    $region6: #{tpu_custom_call.1} parent=1 // loop_footer
      %s19 = sadd.s32 1, %s15
    $region7: #{tpu_custom_call.1} parent=1 // loop_footer_branch
      %14 = sbr.rel target = $region3
    $region8: #{tpu_custom_call.1} parent=1 // loop_exit
      _
    %241 = vsyncpa [#allocation3], 1
    %s242 = scalar_lea.sflag [#allocation3], 1
    %243 = vsyncpa %s242, 1
    %244 = vsyncpa [#allocation6], 1
    %s245 = scalar_lea.sflag [#allocation6], 1
    %246 = vsyncpa %s245, 1
    %247 = vsyncpa [#allocation4], 1
    %s248 = scalar_lea.sflag [#allocation4], 1
    %249 = vsyncpa %s248, 1

</llo_original>
